<compile_context>
chip_gen: v5e
topology: v5e:2x2
jax: 0.10.0
libtpu: 0.0.40
codegen_flags: <defaults>
</compile_context>

<pallas_src>
import jax
import jax.numpy as jnp
from jax import lax
from jax.experimental import pallas as pl
from jax.experimental.pallas import tpu as pltpu


def _policy_kernel(x_ref, w_ref, b_ref, o_ref):
    # x_ref: [TB, N]; w_ref: [N_out, N_in] (PyTorch layout, NOT transposed);
    # b_ref: [1, N_out]
    # Contract x dim 1 (features) with w dim 1 (in_features) -> [TB, N_out].
    z = lax.dot_general(
        x_ref[...],
        w_ref[...],
        dimension_numbers=(((1,), (1,)), ((), ())),
        preferred_element_type=jnp.float32,
    )
    z = z + b_ref[...]                       # bias broadcast over batch rows (VPU)
    o_ref[...] = jax.nn.sigmoid(z).astype(o_ref.dtype)   # sigmoid on EUP, f32


def policy_network_forward(x, weight, bias, *, block_b=512):
    """sigmoid(x @ weight.T + bias) matching torch.nn.Linear(n, n) semantics.

    x:      [B, N] float32
    weight: [N, N] float32  (PyTorch layout: [out_features, in_features])
    bias:   [N]    float32
    """
    B, N = x.shape
    b2d = bias.reshape(1, N)                 # metadata-only reshape (2-D for TPU)

    # Batch tile: either the whole batch (small B) or 512-row blocks (multiple of 8).
    tb = B if B <= block_b else block_b
    grid = (pl.cdiv(B, tb),)

    return pl.pallas_call(
        _policy_kernel,
        out_shape=jax.ShapeDtypeStruct((B, N), x.dtype),
        grid_spec=pl.GridSpec(
            grid=grid,
            in_specs=[
                pl.BlockSpec((tb, N), lambda i: (i, 0)),   # x: tiled over batch
                pl.BlockSpec((N, N), lambda i: (0, 0)),    # W: resident across grid
                pl.BlockSpec((1, N), lambda i: (0, 0)),    # bias: resident
            ],
            out_specs=pl.BlockSpec((tb, N), lambda i: (i, 0)),
        ),
        compiler_params=pltpu.CompilerParams(
            dimension_semantics=("parallel",),             # megacore sharding (v7x)
        ),
    )(x, weight, b2d)


def _reference(x, weight, bias):
    return jax.nn.sigmoid(x @ weight.T + bias)


if __name__ == "__main__":
    key = jax.random.PRNGKey(0)
    k_x, k_w, k_b = jax.random.split(key, 3)

    batch = 8
    n_nations = 32

    # Deterministic synthetic parameters (shapes match nn.Linear(n_nations, n_nations))
    x = jax.random.normal(k_x, (batch, n_nations), dtype=jnp.float32)
    weight = jax.random.normal(k_w, (n_nations, n_nations), dtype=jnp.float32) * 0.1
    bias = jax.random.normal(k_b, (n_nations,), dtype=jnp.float32) * 0.1

    out = policy_network_forward(x, weight, bias)
    out = jax.block_until_ready(out)

    ref = _reference(x, weight, bias)
    assert out.shape == (batch, n_nations)
    assert jnp.allclose(out, ref, atol=1e-5, rtol=1e-5), "mismatch vs reference"

    print("KERNEL_OK")
</pallas_src>

<mosaic_0001>
module attributes {stable_mosaic.version = 11 : i64} {
  func.func @_policy_kernel(%arg0: i32, %arg1: memref<8x32xf32, #tpu.memory_space<vmem>>, %arg2: memref<32x32xf32, #tpu.memory_space<vmem>>, %arg3: memref<1x32xf32, #tpu.memory_space<vmem>>, %arg4: memref<8x32xf32, #tpu.memory_space<vmem>>) attributes {dimension_semantics = [#tpu.dimension_semantics<parallel>], iteration_bounds = array<i64: 1>, scalar_prefetch = 0 : i64, scratch_operands = 0 : i64, tpu.core_type = #tpu.core_type<tc>, window_params = [{transform_indices = @transform_0, window_bounds = array<i64: 8, 32>}, {pipeline_mode = #tpu.pipeline_mode<synchronous>, transform_indices = @transform_1, window_bounds = array<i64: 32, 32>}, {pipeline_mode = #tpu.pipeline_mode<synchronous>, transform_indices = @transform_2, window_bounds = array<i64: 1, 32>}, {transform_indices = @transform_3, window_bounds = array<i64: 8, 32>}]} {
    %c0 = arith.constant 0 : index
    %c0_0 = arith.constant 0 : index
    %0 = vector.load %arg1[%c0, %c0_0] : memref<8x32xf32, #tpu.memory_space<vmem>>, vector<8x32xf32>
    %c0_1 = arith.constant 0 : index
    %c0_2 = arith.constant 0 : index
    %1 = vector.load %arg2[%c0_1, %c0_2] : memref<32x32xf32, #tpu.memory_space<vmem>>, vector<32x32xf32>
    %cst = arith.constant dense<0.000000e+00> : vector<8x32xf32>
    %2 = tpu.matmul %0, %1, %cst {dimension_numbers = #tpu.dot_dimension_numbers<[1], [1], [0], [0], [0, 0, 1, 0], [], []>} : vector<8x32xf32>, vector<32x32xf32>, vector<8x32xf32> -> vector<8x32xf32>
    %c0_3 = arith.constant 0 : index
    %c0_4 = arith.constant 0 : index
    %3 = vector.load %arg3[%c0_3, %c0_4] : memref<1x32xf32, #tpu.memory_space<vmem>>, vector<1x32xf32>
    %4 = vector.broadcast %3 : vector<1x32xf32> to vector<8x32xf32>
    %5 = arith.addf %2, %4 : vector<8x32xf32>
    %6 = arith.negf %5 : vector<8x32xf32>
    %7 = math.exp %6 : vector<8x32xf32>
    %cst_5 = arith.constant 1.000000e+00 : f32
    %8 = vector.broadcast %cst_5 : f32 to vector<8x32xf32>
    %9 = arith.addf %8, %7 : vector<8x32xf32>
    %10 = arith.divf %8, %9 : vector<8x32xf32>
    %c0_6 = arith.constant 0 : index
    %c0_7 = arith.constant 0 : index
    %11 = vector.load %arg4[%c0_6, %c0_7] : memref<8x32xf32, #tpu.memory_space<vmem>>, vector<8x32xf32>
    tpu.vector_store %arg4[%c0_6, %c0_7], %10 {strides = array<i32>} : memref<8x32xf32, #tpu.memory_space<vmem>>, vector<8x32xf32>,
    return
  }
  func.func @transform_0(%arg0: i32) -> (i32, i32) {
    %c0_i32 = arith.constant 0 : i32
    %c0_i32_0 = arith.constant 0 : i32
    return %arg0, %c0_i32 : i32, i32
  }
  func.func @transform_1(%arg0: i32) -> (i32, i32) {
    %c0_i32 = arith.constant 0 : i32
    %c0_i32_0 = arith.constant 0 : i32
    %c0_i32_1 = arith.constant 0 : i32
    return %c0_i32, %c0_i32_0 : i32, i32
  }
  func.func @transform_2(%arg0: i32) -> (i32, i32) {
    %c0_i32 = arith.constant 0 : i32
    %c0_i32_0 = arith.constant 0 : i32
    %c0_i32_1 = arith.constant 0 : i32
    return %c0_i32, %c0_i32_0 : i32, i32
  }
  func.func @transform_3(%arg0: i32) -> (i32, i32) {
    %c0_i32 = arith.constant 0 : i32
    %c0_i32_0 = arith.constant 0 : i32
    return %arg0, %c0_i32 : i32, i32
  }
}

</mosaic_0001>

<llo_original>
// kernel: tpu_custom_call.1
$region0: #{tpu_custom_call.1}
  #allocation0 [shape = 'u32[]', space=smem, size = 0x4, offset = 0x4, fixed_abs, tag = 'smem constant byte address 0x4 - core index']
  #allocation1 [shape = 'u32[72,128]{1,0:T(1,128)}', space=vmem, size = 0x9000, scoped, tag = 'internal scratch']
  %s0 = inlined_call_operand.hbm [shape: f32[8,32], index: 0, kind: input, shape index: {}]
  %s1 = inlined_call_operand.hbm [shape: f32[32,32], index: 1, kind: input, shape index: {}]
  %s2 = inlined_call_operand.vmem [shape: f32[1,32], index: 2, kind: input, shape index: {}]
  %s3 = inlined_call_operand.hbm [shape: f32[8,32], index: 3, kind: output, shape index: {}]
  %s4 = sld [smem:[#allocation0]]
  $region30: #{tpu_custom_call.1} parent=0
    _
  %s6 = ssub.s32 1, %s4
  %s7 = scalar_select 0, %s6, %s4
  $region1: #{tpu_custom_call.1} parent=0
    #allocation2 [shape = 'u8[4096]{0}', space=vmem, size = 0x1000, scoped, tag = 'input window, operand 0, single buffered']
    #allocation3 [shape = 's32[1]{0}', space=sflag, size = 0x4, scoped, tag = 'scoped memory for tpu_custom_call.1']
    #allocation4 [shape = 's32[1]{0}', space=sflag, size = 0x4, scoped, tag = 'scoped memory for tpu_custom_call.1']
    #allocation5 [shape = 'u8[16384]{0}', space=vmem, size = 0x4000, scoped, tag = 'input window, operand 1, single buffered']
    #allocation6 [shape = 's32[1]{0}', space=sflag, size = 0x4, scoped, tag = 'scoped memory for tpu_custom_call.1']
    #allocation7 [shape = 'u8[4096]{0}', space=vmem, size = 0x1000, scoped, tag = 'output window, operand 0, single buffered']
    %8 = vsyncpa [#allocation3], 0
    %9 = vsyncpa [#allocation6], 0
    %10 = vsyncpa [#allocation4], 0
    // Predicated region
    $region2: #{tpu_custom_call.1} parent=1 // pred_check
      _
    $region3: #{tpu_custom_call.1} parent=1 // pred_check_branch
      %12 = sbr.rel (0) target = $region5
    $region4: #{tpu_custom_call.1} parent=1 // pred_region
      %14 = vsyncadd [#allocation3], 0
      %s16 = sshll.u32 %s0, 4
      %s17 = int_to_ptr.hbm [resolvable:$true] %s16
      %s18 = sshll.u32 [#allocation2], 4
      %s19 = int_to_ptr.vmem [resolvable:$true] %s18
      %21 = dma.hbm_to_vmem [thread:$0]  %s17, 128, %s19, [#allocation3]
    $region5: #{tpu_custom_call.1} parent=1 // pred_fallthru
      _
    // Predicated region
    $region6: #{tpu_custom_call.1} parent=1 // pred_check
      _
    $region7: #{tpu_custom_call.1} parent=1 // pred_check_branch
      %23 = sbr.rel (0) target = $region9
    $region8: #{tpu_custom_call.1} parent=1 // pred_region
      %25 = vsyncadd [#allocation6], 0
      %s26 = sshll.u32 %s1, 4
      %s27 = int_to_ptr.hbm [resolvable:$true] %s26
      %s28 = sshll.u32 [#allocation5], 4
      %s29 = int_to_ptr.vmem [resolvable:$true] %s28
      %34 = dma.hbm_to_vmem [thread:$0]  %s27, 512, %s29, [#allocation6], 128, 128, 8
    $region9: #{tpu_custom_call.1} parent=1 // pred_fallthru
      _
    // Predicated region
    $region10: #{tpu_custom_call.1} parent=1 // pred_check
      _
    $region11: #{tpu_custom_call.1} parent=1 // pred_check_branch
      %36 = sbr.rel (0) target = $region13
    $region12: #{tpu_custom_call.1} parent=1 // pred_region
      _
    $region13: #{tpu_custom_call.1} parent=1 // pred_fallthru
      _
    // Predicated region
    $region14: #{tpu_custom_call.1} parent=1 // pred_check
      _
    $region15: #{tpu_custom_call.1} parent=1 // pred_check_branch
      %38 = sbr.rel (0) target = $region17
    $region16: #{tpu_custom_call.1} parent=1 // pred_region
      %40 = dma.done [#allocation3], 128
    $region17: #{tpu_custom_call.1} parent=1 // pred_fallthru
      _
    // Predicated region
    $region18: #{tpu_custom_call.1} parent=1 // pred_check
      _
    $region19: #{tpu_custom_call.1} parent=1 // pred_check_branch
      %42 = sbr.rel (0) target = $region21
    $region20: #{tpu_custom_call.1} parent=1 // pred_region
      %44 = dma.done [#allocation6], 512
    $region21: #{tpu_custom_call.1} parent=1 // pred_fallthru
      _
    %v45 = vld [vmem:[#allocation2] sm:$0xff]
    %v46 = vld [vmem:[#allocation5] sm:$0xff]
    %v47 = vld [vmem:[#allocation5 + $0x8] sm:$0xff]
    %v48 = vld [vmem:[#allocation5 + $0x10] sm:$0xff]
    %v49 = vld [vmem:[#allocation5 + $0x18] sm:$0xff]
    %v50 = vld [vmem:[%s2] sm:$0x1]
    %v52 = vperm.slane %v50, 0
    %vm54 = vcmask 261120
    %v56 = vsel %vm54, %v45, 0
    %v59 = vsel %vm54, %v46, 0
    %v62 = vsel %vm54, %v47, 0
    %v65 = vsel %vm54, %v48, 0
    %v68 = vsel %vm54, %v49, 0
    %70 = vmatpush.xpose.msra.mxu0 0.0
    %71 = vmatpush.xpose.msra.mxu0 0.0
    %72 = vmatpush.xpose.msra.mxu0 0.0
    %73 = vmatpush.xpose.msra.mxu0 0.0
    %74 = vmatpush.xpose.msra.mxu0 0.0
    %75 = vmatpush.xpose.msra.mxu0 0.0
    %76 = vmatpush.xpose.msra.mxu0 0.0
    %77 = vmatpush.xpose.msra.mxu0 0.0
    %78 = vmatpush.xpose.msra.mxu0 0.0
    %79 = vmatpush.xpose.msra.mxu0 0.0
    %80 = vmatpush.xpose.msra.mxu0 0.0
    %81 = vmatpush.xpose.msra.mxu0 0.0
    %82 = vmatpush.xpose.msra.mxu0 %v68
    %83 = vmatpush.xpose.msra.mxu0 %v65
    %84 = vmatpush.xpose.msra.mxu0 %v62
    %85 = vmatpush.xpose.msra.mxu0 %v59
    %86 = vmatmul.f32.gmra.mxu0 %v56
    %v87 = vpop.f32.mrf.mxu0
    %v88 = vadd.f32 %v52, %v87
    %89 = vdwg.mxu0
    %v90 = vxor.u32 %v88, 2147483648
    %v91 = vmul.f32 %v90, 1.442695
    %v92 = vpow.pop %v91
    %v93 = vadd.f32 %v92, 1.0
    %v94 = vrcp.pop %v93
    %v95 = vmul.f32 %v93, %v94
    %v96 = vsub.f32 1.0, %v95
    %v97 = vmul.f32 %v94, %v96
    %v98 = vadd.f32 %v94, %v97
    %vm99 = vweird.f32 %v93
    %vm100 = vweird.f32 %v94
    %vm101 = vmor %vm99, %vm100
    %v102 = vsel %vm101, %v94, %v98
    %v103 = vand.u32 2147483647, %v93
    %vm104 = vcmp.eq.f32.partialorder %v103, 8.507059e+37
    %v105 = vand.u32 %v93, 2147483648
    %v106 = vor.u32 1.1754944e-38, %v105
    %v107 = vsel %vm104, %v106, %v102
    %v108 = vmul.f32 1.0, %v107
    %109 = vst.msk [vmem:[#allocation7] sm:$0xff] %vm54, %v108
    // Predicated region
    $region22: #{tpu_custom_call.1} parent=1 // pred_check
      _
    $region23: #{tpu_custom_call.1} parent=1 // pred_check_branch
      %111 = sbr.rel (0) target = $region25
    $region24: #{tpu_custom_call.1} parent=1 // pred_region
      %113 = vsyncadd [#allocation4], 0
      %s115 = sshll.u32 [#allocation7], 4
      %s116 = int_to_ptr.vmem [resolvable:$true] %s115
      %s117 = sshll.u32 %s3, 4
      %s118 = int_to_ptr.hbm [resolvable:$true] %s117
      %120 = dma.vmem_to_hbm [thread:$0]  %s116, 128, %s118, [#allocation4]
    $region25: #{tpu_custom_call.1} parent=1 // pred_fallthru
      _
    // Predicated region
    $region26: #{tpu_custom_call.1} parent=1 // pred_check
      _
    $region27: #{tpu_custom_call.1} parent=1 // pred_check_branch
      %122 = sbr.rel (0) target = $region29
    $region28: #{tpu_custom_call.1} parent=1 // pred_region
      %124 = dma.done [#allocation4], 128
    $region29: #{tpu_custom_call.1} parent=1 // pred_fallthru
      _
    %125 = vsyncpa [#allocation3], 1
    %126 = vsyncpa [#allocation6], 1
    %127 = vsyncpa [#allocation4], 1

</llo_original>
